<compile_context>
chip_gen: v5e
topology: v5e:2x2
jax: 0.10.0
libtpu: 0.0.40
codegen_flags: <defaults>
</compile_context>

<pallas_src>
import functools

import numpy as np
import jax
import jax.numpy as jnp
from jax import lax
from jax.experimental import pallas as pl
from jax.experimental.pallas import tpu as pltpu

EPS = 1e-5  # nn.BatchNorm2d default eps
PAD = 4     # DWConvBlock(kernel_size=3, padding=4, dilation=4)
DIL = 4


# --------------------------------------------------------------------------
# Host-side helpers: align_corners=True interpolation matrices (+ folded pad).
# --------------------------------------------------------------------------
def _resize_matrix_np(out_size, in_size):
    """Matrix M such that (M @ x) == F.interpolate(x, align_corners=True)."""
    m = np.zeros((out_size, in_size), np.float32)
    if out_size == 1:
        m[0, 0] = 1.0  # TODO(synk): degenerate 1-pixel output (maps to src idx 0)
        return m
    src = np.arange(out_size, dtype=np.float64) * (in_size - 1) / (out_size - 1)
    i0 = np.clip(np.floor(src).astype(np.int64), 0, in_size - 1)
    i1 = np.clip(i0 + 1, 0, in_size - 1)
    w1 = (src - i0).astype(np.float32)
    w0 = 1.0 - w1
    m[np.arange(out_size), i0] += w0
    m[np.arange(out_size), i1] += w1
    return m


def _padded_resize_matrix_np(out_size, in_size, pad):
    """Resize matrix with `pad` zero rows folded in on both sides (= conv zero-pad)."""
    m = np.zeros((out_size + 2 * pad, in_size), np.float32)
    m[pad:pad + out_size, :] = _resize_matrix_np(out_size, in_size)
    return m


def _pick_tile(total, target, mult):
    """Largest divisor of `total` <= target, preferring multiples of `mult`."""
    best = None
    for cand in range(min(target, total), 0, -1):
        if total % cand == 0:
            if cand % mult == 0:
                return cand
            if best is None:
                best = cand
    return best if best is not None else total


# --------------------------------------------------------------------------
# Kernel 1: fused upsample + (folded) zero-pad + depthwise dilated 3x3 conv
#           + folded BN + ReLU.  One (batch, channel, row-tile) per grid step.
# --------------------------------------------------------------------------
def _lowres_branch_kernel(TH, pad, dil, x_ref, mwT_ref, mh_ref, w_smem, b_smem, o_ref):
    c = pl.program_id(1)
    t = pl.program_id(2)
    W = o_ref.shape[3]
    THp = TH + 2 * pad

    x = x_ref[0, 0]                                                      # (h, w)
    # Width resample into the padded-W frame (pad cols are zero cols of mwT).
    tw = jnp.dot(x, mwT_ref[...], preferred_element_type=jnp.float32)   # (h, W+2p)
    # Height resample for exactly the padded rows this tile's conv reads.
    row0 = pl.multiple_of(t * TH, 8) if TH % 8 == 0 else t * TH
    mh_blk = mh_ref[pl.ds(row0, THp), :]                                 # (THp, h)
    u = jnp.dot(mh_blk, tw, preferred_element_type=jnp.float32)          # (THp, W+2p)

    # Depthwise dilated 3x3 conv; BN scale is already folded into the taps.
    acc = jnp.zeros((TH, W), jnp.float32)
    for kh in range(3):
        for kw in range(3):
            wgt = w_smem[c, kh * 3 + kw]                                 # SMEM scalar
            acc = acc + wgt * u[kh * dil:kh * dil + TH, kw * dil:kw * dil + W]
    o_ref[0, 0] = jnp.maximum(acc + b_smem[c], 0.0)


def lowres_branch(x_nchw, out_hw, dw_w_eff, dw_bias, *, pad=PAD, dil=DIL, row_tile=32):
    N, C, h, w = x_nchw.shape
    H, W = out_hw
    TH = _pick_tile(H, row_tile, 8)
    mh_pad = jnp.asarray(_padded_resize_matrix_np(H, h, pad))            # (H+2p, h)
    mw_padT = jnp.asarray(_padded_resize_matrix_np(W, w, pad).T)         # (w, W+2p)
    kernel = functools.partial(_lowres_branch_kernel, TH, pad, dil)
    return pl.pallas_call(
        kernel,
        out_shape=jax.ShapeDtypeStruct((N, C, H, W), jnp.float32),
        grid=(N, C, H // TH),
        in_specs=[
            pl.BlockSpec((1, 1, h, w), lambda n, c, t: (n, c, 0, 0)),
            pl.BlockSpec((w, W + 2 * pad), lambda n, c, t: (0, 0)),
            pl.BlockSpec((H + 2 * pad, h), lambda n, c, t: (0, 0)),
            pl.BlockSpec(memory_space=pltpu.MemorySpace.SMEM),           # (C, 9) taps
            pl.BlockSpec(memory_space=pltpu.MemorySpace.SMEM),           # (C,) bias
        ],
        out_specs=pl.BlockSpec((1, 1, TH, W), lambda n, c, t: (n, c, t, 0)),
        compiler_params=pltpu.CompilerParams(
            dimension_semantics=("parallel", "parallel", "parallel")),
    )(x_nchw, mw_padT, mh_pad, dw_w_eff, dw_bias)


# --------------------------------------------------------------------------
# Kernel 2: channel-major fused 1x1 convs (BN folded) + add + final ReLU.
#   out[:, :, s] = relu(W_lr @ y[:, :, s] + W_hr @ hr[:, :, s] + b)
# Spatial (H*W) sits on lanes (lane-dense), output is NCHW directly.
# --------------------------------------------------------------------------
def _fuse_kernel(y_ref, hr_ref, wlr_ref, whr_ref, b_ref, o_ref):
    acc = jnp.dot(wlr_ref[...], y_ref[0], preferred_element_type=jnp.float32)
    acc = acc + jnp.dot(whr_ref[...], hr_ref[0], preferred_element_type=jnp.float32)
    o_ref[0] = jnp.maximum(acc + b_ref[...], 0.0)


def fuse_1x1(y_ncs, hr_ncs, w_lr_eff, w_hr_eff, b_sum, *, spatial_tile=2048):
    N, C_lr, S = y_ncs.shape
    C_hr = hr_ncs.shape[1]
    C_out = w_lr_eff.shape[0]
    TS = _pick_tile(S, spatial_tile, 128)
    return pl.pallas_call(
        _fuse_kernel,
        out_shape=jax.ShapeDtypeStruct((N, C_out, S), jnp.float32),
        grid=(N, S // TS),
        in_specs=[
            pl.BlockSpec((1, C_lr, TS), lambda n, s: (n, 0, s)),
            pl.BlockSpec((1, C_hr, TS), lambda n, s: (n, 0, s)),
            pl.BlockSpec((C_out, C_lr), lambda n, s: (0, 0)),
            pl.BlockSpec((C_out, C_hr), lambda n, s: (0, 0)),
            pl.BlockSpec((C_out, 1), lambda n, s: (0, 0)),
        ],
        out_specs=pl.BlockSpec((1, C_out, TS), lambda n, s: (n, 0, s)),
        compiler_params=pltpu.CompilerParams(
            dimension_semantics=("parallel", "parallel")),
    )(y_ncs, hr_ncs, w_lr_eff, w_hr_eff, b_sum)


# --------------------------------------------------------------------------
# FeatureFusionModule forward (wrapper: only free trailing-dim reshapes).
# --------------------------------------------------------------------------
def feature_fusion_forward(lowres, highres, params, *, row_tile=32, spatial_tile=2048):
    N, C_lr, h, w = lowres.shape
    _, C_hr, H, W = highres.shape
    y = lowres_branch(lowres, (H, W), params["dw_w_eff"], params["dw_bias_f"],
                      row_tile=row_tile)                               # (N, C_lr, H, W)
    out = fuse_1x1(y.reshape(N, C_lr, H * W),
                   highres.reshape(N, C_hr, H * W),
                   params["w_lr_eff"], params["w_hr_eff"], params["b_sum"],
                   spatial_tile=spatial_tile)                          # (N, C_out, H*W)
    return out.reshape(N, -1, H, W)


# --------------------------------------------------------------------------
# Deterministic parameter init (shapes from the PyTorch __init__), BN folded.
# --------------------------------------------------------------------------
def init_params(key, C_lr, C_hr, C_out):
    ks = jax.random.split(key, 15)
    dw_w = jax.random.normal(ks[0], (C_lr, 1, 3, 3), jnp.float32) * 0.2
    w_lr = jax.random.normal(ks[1], (C_out, C_lr, 1, 1), jnp.float32) * 0.2
    w_hr = jax.random.normal(ks[2], (C_out, C_hr, 1, 1), jnp.float32) * 0.2

    def bn(kg, kb, km, kv, C):
        gamma = 1.0 + 0.1 * jax.random.normal(kg, (C,), jnp.float32)
        beta = 0.1 * jax.random.normal(kb, (C,), jnp.float32)
        mean = 0.1 * jax.random.normal(km, (C,), jnp.float32)
        var = jnp.abs(jax.random.normal(kv, (C,), jnp.float32)) + 0.5
        scale = gamma / jnp.sqrt(var + EPS)
        bias = beta - mean * scale
        return scale, bias

    dw_scale, dw_bias = bn(ks[3], ks[4], ks[5], ks[6], C_lr)
    lr_scale, lr_bias = bn(ks[7], ks[8], ks[9], ks[10], C_out)
    hr_scale, hr_bias = bn(ks[11], ks[12], ks[13], ks[14], C_out)

    return dict(
        # raw params (used by the pure-JAX reference)
        dw_w=dw_w, w_lr=w_lr, w_hr=w_hr,
        dw_scale=dw_scale, dw_bias=dw_bias,
        lr_scale=lr_scale, lr_bias=lr_bias, hr_scale=hr_scale, hr_bias=hr_bias,
        # kernel-ready params (inference-mode BN folded)
        dw_w_eff=dw_w[:, 0].reshape(C_lr, 9) * dw_scale[:, None],      # (C_lr, 9)
        dw_bias_f=dw_bias,                                             # (C_lr,)
        w_lr_eff=w_lr[:, :, 0, 0] * lr_scale[:, None],                 # (C_out, C_lr)
        w_hr_eff=w_hr[:, :, 0, 0] * hr_scale[:, None],                 # (C_out, C_hr)
        b_sum=(lr_bias + hr_bias)[:, None],                            # (C_out, 1)
    )


# --------------------------------------------------------------------------
# Pure-JAX reference (same math, standard XLA convs) for correctness check.
# --------------------------------------------------------------------------
def reference_forward(lowres, highres, params):
    N, C_lr, h, w = lowres.shape
    _, C_hr, H, W = highres.shape
    mh = jnp.asarray(_resize_matrix_np(H, h))
    mw = jnp.asarray(_resize_matrix_np(W, w))
    up = jnp.einsum("Hh,nchw,Ww->ncHW", mh, lowres, mw)
    y = lax.conv_general_dilated(
        up, params["dw_w"], window_strides=(1, 1), padding=((PAD, PAD), (PAD, PAD)),
        rhs_dilation=(DIL, DIL), feature_group_count=C_lr,
        dimension_numbers=("NCHW", "OIHW", "NCHW"))
    y = y * params["dw_scale"][None, :, None, None] + params["dw_bias"][None, :, None, None]
    y = jnp.maximum(y, 0.0)
    y = lax.conv_general_dilated(y, params["w_lr"], (1, 1), "VALID",
                                 dimension_numbers=("NCHW", "OIHW", "NCHW"))
    y = y * params["lr_scale"][None, :, None, None] + params["lr_bias"][None, :, None, None]
    z = lax.conv_general_dilated(highres, params["w_hr"], (1, 1), "VALID",
                                 dimension_numbers=("NCHW", "OIHW", "NCHW"))
    z = z * params["hr_scale"][None, :, None, None] + params["hr_bias"][None, :, None, None]
    return jnp.maximum(y + z, 0.0)


if __name__ == "__main__":
    key = jax.random.PRNGKey(0)
    k_lr, k_hr, k_p = jax.random.split(key, 3)

    # Small shapes: lowres branch is lower-resolution (1/4 spatial) than highres.
    N, C_lr, C_hr, C_out = 2, 8, 6, 16
    h, w = 4, 4
    H, W = 16, 16

    lowres = jax.random.normal(k_lr, (N, C_lr, h, w), jnp.float32)
    highres = jax.random.normal(k_hr, (N, C_hr, H, W), jnp.float32)
    params = init_params(k_p, C_lr, C_hr, C_out)

    # row_tile=8 exercises the multi-row-tile (H-tiled) path on the small test.
    out = feature_fusion_forward(lowres, highres, params, row_tile=8)
    out = jax.block_until_ready(out)

    ref = reference_forward(lowres, highres, params)
    np.testing.assert_allclose(np.asarray(out), np.asarray(ref), atol=1e-4, rtol=1e-4)

    print("KERNEL_OK")
</pallas_src>

<mosaic_0001>
module attributes {stable_mosaic.version = 11 : i64} {
  func.func @_lowres_branch_kernel(%arg0: i32, %arg1: i32, %arg2: i32, %arg3: memref<1x1x4x4xf32, #tpu.memory_space<vmem>>, %arg4: memref<4x24xf32, #tpu.memory_space<vmem>>, %arg5: memref<24x4xf32, #tpu.memory_space<vmem>>, %arg6: memref<8x9xf32, #tpu.memory_space<smem>>, %arg7: memref<8xf32, #tpu.memory_space<smem>>, %arg8: memref<1x1x8x16xf32, #tpu.memory_space<vmem>>) attributes {dimension_semantics = [#tpu.dimension_semantics<parallel>, #tpu.dimension_semantics<parallel>, #tpu.dimension_semantics<parallel>], iteration_bounds = array<i64: 2, 8, 2>, scalar_prefetch = 0 : i64, scratch_operands = 0 : i64, tpu.core_type = #tpu.core_type<tc>, window_params = [{transform_indices = @transform_0, window_bounds = array<i64: 1, 1, 4, 4>}, {pipeline_mode = #tpu.pipeline_mode<synchronous>, transform_indices = @transform_1, window_bounds = array<i64: 4, 24>}, {pipeline_mode = #tpu.pipeline_mode<synchronous>, transform_indices = @transform_2, window_bounds = array<i64: 24, 4>}, {transform_indices = @transform_3, window_bounds = array<i64: 8, 9>}, {transform_indices = @transform_4, window_bounds = array<i64: 8>}, {transform_indices = @transform_5, window_bounds = array<i64: 1, 1, 8, 16>}]} {
    %c0 = arith.constant 0 : index
    %c0_0 = arith.constant 0 : index
    %c0_1 = arith.constant 0 : index
    %c0_2 = arith.constant 0 : index
    %0 = vector.load %arg3[%c0, %c0_0, %c0_1, %c0_2] : memref<1x1x4x4xf32, #tpu.memory_space<vmem>>, vector<1x1x4x4xf32>
    %1 = vector.shape_cast %0 : vector<1x1x4x4xf32> to vector<4x4xf32>
    %c0_3 = arith.constant 0 : index
    %c0_4 = arith.constant 0 : index
    %2 = vector.load %arg4[%c0_3, %c0_4] : memref<4x24xf32, #tpu.memory_space<vmem>>, vector<4x24xf32>
    %cst = arith.constant dense<0.000000e+00> : vector<4x24xf32>
    %3 = tpu.matmul %1, %2, %cst {dimension_numbers = #tpu.dot_dimension_numbers<[1], [0], [0], [1], [0, 0, 1, 1], [], []>} : vector<4x4xf32>, vector<4x24xf32>, vector<4x24xf32> -> vector<4x24xf32>
    %c8_i32 = arith.constant 8 : i32
    %4 = arith.muli %arg2, %c8_i32 : i32
    %5 = tpu.assume_multiple %4, 8 : i32
    %6 = arith.index_cast %5 : i32 to index
    %c0_5 = arith.constant 0 : index
    %7 = vector.load %arg5[%6, %c0_5] : memref<24x4xf32, #tpu.memory_space<vmem>>, vector<16x4xf32>
    %cst_6 = arith.constant dense<0.000000e+00> : vector<16x24xf32>
    %8 = tpu.matmul %7, %3, %cst_6 {dimension_numbers = #tpu.dot_dimension_numbers<[1], [0], [0], [1], [0, 0, 1, 1], [], []>} : vector<16x4xf32>, vector<4x24xf32>, vector<16x24xf32> -> vector<16x24xf32>
    %cst_7 = arith.constant 0.000000e+00 : f32
    %9 = vector.broadcast %cst_7 : f32 to vector<8x16xf32>
    %10 = arith.index_cast %arg1 : i32 to index
    %c0_8 = arith.constant 0 : index
    %11 = memref.load %arg6[%10, %c0_8] : memref<8x9xf32, #tpu.memory_space<smem>>
    %12 = vector.extract_strided_slice %8 {offsets = [0, 0], sizes = [8, 16], strides = [1, 1]} : vector<16x24xf32> to vector<8x16xf32>
    %13 = vector.broadcast %11 : f32 to vector<8x16xf32>
    %14 = arith.mulf %13, %12 : vector<8x16xf32>
    %15 = arith.addf %9, %14 : vector<8x16xf32>
    %16 = arith.index_cast %arg1 : i32 to index
    %c1 = arith.constant 1 : index
    %17 = memref.load %arg6[%16, %c1] : memref<8x9xf32, #tpu.memory_space<smem>>
    %18 = vector.extract_strided_slice %8 {offsets = [0, 4], sizes = [8, 16], strides = [1, 1]} : vector<16x24xf32> to vector<8x16xf32>
    %19 = vector.broadcast %17 : f32 to vector<8x16xf32>
    %20 = arith.mulf %19, %18 : vector<8x16xf32>
    %21 = arith.addf %15, %20 : vector<8x16xf32>
    %22 = arith.index_cast %arg1 : i32 to index
    %c2 = arith.constant 2 : index
    %23 = memref.load %arg6[%22, %c2] : memref<8x9xf32, #tpu.memory_space<smem>>
    %24 = vector.extract_strided_slice %8 {offsets = [0, 8], sizes = [8, 16], strides = [1, 1]} : vector<16x24xf32> to vector<8x16xf32>
    %25 = vector.broadcast %23 : f32 to vector<8x16xf32>
    %26 = arith.mulf %25, %24 : vector<8x16xf32>
    %27 = arith.addf %21, %26 : vector<8x16xf32>
    %28 = arith.index_cast %arg1 : i32 to index
    %c3 = arith.constant 3 : index
    %29 = memref.load %arg6[%28, %c3] : memref<8x9xf32, #tpu.memory_space<smem>>
    %30 = vector.extract_strided_slice %8 {offsets = [4, 0], sizes = [8, 16], strides = [1, 1]} : vector<16x24xf32> to vector<8x16xf32>
    %31 = vector.broadcast %29 : f32 to vector<8x16xf32>
    %32 = arith.mulf %31, %30 : vector<8x16xf32>
    %33 = arith.addf %27, %32 : vector<8x16xf32>
    %34 = arith.index_cast %arg1 : i32 to index
    %c4 = arith.constant 4 : index
    %35 = memref.load %arg6[%34, %c4] : memref<8x9xf32, #tpu.memory_space<smem>>
    %36 = vector.extract_strided_slice %8 {offsets = [4, 4], sizes = [8, 16], strides = [1, 1]} : vector<16x24xf32> to vector<8x16xf32>
    %37 = vector.broadcast %35 : f32 to vector<8x16xf32>
    %38 = arith.mulf %37, %36 : vector<8x16xf32>
    %39 = arith.addf %33, %38 : vector<8x16xf32>
    %40 = arith.index_cast %arg1 : i32 to index
    %c5 = arith.constant 5 : index
    %41 = memref.load %arg6[%40, %c5] : memref<8x9xf32, #tpu.memory_space<smem>>
    %42 = vector.extract_strided_slice %8 {offsets = [4, 8], sizes = [8, 16], strides = [1, 1]} : vector<16x24xf32> to vector<8x16xf32>
    %43 = vector.broadcast %41 : f32 to vector<8x16xf32>
    %44 = arith.mulf %43, %42 : vector<8x16xf32>
    %45 = arith.addf %39, %44 : vector<8x16xf32>
    %46 = arith.index_cast %arg1 : i32 to index
    %c6 = arith.constant 6 : index
    %47 = memref.load %arg6[%46, %c6] : memref<8x9xf32, #tpu.memory_space<smem>>
    %48 = vector.extract_strided_slice %8 {offsets = [8, 0], sizes = [8, 16], strides = [1, 1]} : vector<16x24xf32> to vector<8x16xf32>
    %49 = vector.broadcast %47 : f32 to vector<8x16xf32>
    %50 = arith.mulf %49, %48 : vector<8x16xf32>
    %51 = arith.addf %45, %50 : vector<8x16xf32>
    %52 = arith.index_cast %arg1 : i32 to index
    %c7 = arith.constant 7 : index
    %53 = memref.load %arg6[%52, %c7] : memref<8x9xf32, #tpu.memory_space<smem>>
    %54 = vector.extract_strided_slice %8 {offsets = [8, 4], sizes = [8, 16], strides = [1, 1]} : vector<16x24xf32> to vector<8x16xf32>
    %55 = vector.broadcast %53 : f32 to vector<8x16xf32>
    %56 = arith.mulf %55, %54 : vector<8x16xf32>
    %57 = arith.addf %51, %56 : vector<8x16xf32>
    %58 = arith.index_cast %arg1 : i32 to index
    %c8 = arith.constant 8 : index
    %59 = memref.load %arg6[%58, %c8] : memref<8x9xf32, #tpu.memory_space<smem>>
    %60 = vector.extract_strided_slice %8 {offsets = [8, 8], sizes = [8, 16], strides = [1, 1]} : vector<16x24xf32> to vector<8x16xf32>
    %61 = vector.broadcast %59 : f32 to vector<8x16xf32>
    %62 = arith.mulf %61, %60 : vector<8x16xf32>
    %63 = arith.addf %57, %62 : vector<8x16xf32>
    %64 = arith.index_cast %arg1 : i32 to index
    %65 = memref.load %arg7[%64] : memref<8xf32, #tpu.memory_space<smem>>
    %66 = vector.broadcast %65 : f32 to vector<8x16xf32>
    %67 = arith.addf %63, %66 : vector<8x16xf32>
    %cst_9 = arith.constant 0.000000e+00 : f32
    %68 = vector.broadcast %cst_9 : f32 to vector<8x16xf32>
    %69 = arith.maximumf %67, %68 : vector<8x16xf32>
    %c0_10 = arith.constant 0 : index
    %c0_11 = arith.constant 0 : index
    %c0_12 = arith.constant 0 : index
    %c0_13 = arith.constant 0 : index
    %70 = vector.load %arg8[%c0_10, %c0_11, %c0_12, %c0_13] : memref<1x1x8x16xf32, #tpu.memory_space<vmem>>, vector<1x1x8x16xf32>
    %71 = vector.shape_cast %70 : vector<1x1x8x16xf32> to vector<8x16xf32>
    %72 = vector.shape_cast %69 : vector<8x16xf32> to vector<1x1x8x16xf32>
    tpu.vector_store %arg8[%c0_10, %c0_11, %c0_12, %c0_13], %72 {strides = array<i32>} : memref<1x1x8x16xf32, #tpu.memory_space<vmem>>, vector<1x1x8x16xf32>,
    return
  }
  func.func @transform_0(%arg0: i32, %arg1: i32, %arg2: i32) -> (i32, i32, i32, i32) {
    %c0_i32 = arith.constant 0 : i32
    %c0_i32_0 = arith.constant 0 : i32
    %c0_i32_1 = arith.constant 0 : i32
    return %arg0, %arg1, %c0_i32, %c0_i32_0 : i32, i32, i32, i32
  }
  func.func @transform_1(%arg0: i32, %arg1: i32, %arg2: i32) -> (i32, i32) {
    %c0_i32 = arith.constant 0 : i32
    %c0_i32_0 = arith.constant 0 : i32
    %c0_i32_1 = arith.constant 0 : i32
    return %c0_i32, %c0_i32_0 : i32, i32
  }
  func.func @transform_2(%arg0: i32, %arg1: i32, %arg2: i32) -> (i32, i32) {
    %c0_i32 = arith.constant 0 : i32
    %c0_i32_0 = arith.constant 0 : i32
    %c0_i32_1 = arith.constant 0 : i32
    return %c0_i32, %c0_i32_0 : i32, i32
  }
  func.func @transform_3(%arg0: i32, %arg1: i32, %arg2: i32) -> (i32, i32) {
    %c0_i32 = arith.constant 0 : i32
    %c0_i32_0 = arith.constant 0 : i32
    %c0_i32_1 = arith.constant 0 : i32
    return %c0_i32, %c0_i32_0 : i32, i32
  }
  func.func @transform_4(%arg0: i32, %arg1: i32, %arg2: i32) -> i32 {
    %c0_i32 = arith.constant 0 : i32
    %c0_i32_0 = arith.constant 0 : i32
    return %c0_i32 : i32
  }
  func.func @transform_5(%arg0: i32, %arg1: i32, %arg2: i32) -> (i32, i32, i32, i32) {
    %c0_i32 = arith.constant 0 : i32
    %c0_i32_0 = arith.constant 0 : i32
    return %arg0, %arg1, %arg2, %c0_i32 : i32, i32, i32, i32
  }
}

</mosaic_0001>

<llo_original>
// kernel: tpu_custom_call.1
$region0: #{tpu_custom_call.1}
  #allocation0 [shape = 'u32[]', space=smem, size = 0x4, offset = 0x4, fixed_abs, tag = 'smem constant byte address 0x4 - core index']
  #allocation1 [shape = 'u32[72,128]{1,0:T(1,128)}', space=vmem, size = 0x9000, scoped, tag = 'internal scratch']
  %s0 = inlined_call_operand.vmem [shape: f32[2,8,4,4], index: 0, kind: input, shape index: {}]
  %s1 = inlined_call_operand.vmem [shape: f32[4,24], index: 1, kind: input, shape index: {}]
  %s2 = inlined_call_operand.vmem [shape: f32[24,4], index: 2, kind: input, shape index: {}]
  %s3 = inlined_call_operand.vmem [shape: f32[8,9], index: 3, kind: input, shape index: {}]
  %s4 = inlined_call_operand.vmem [shape: f32[8], index: 4, kind: input, shape index: {}]
  %s5 = inlined_call_operand.hbm [shape: f32[2,8,16,16], index: 5, kind: output, shape index: {}]
  %s6 = sld [smem:[#allocation0]]
  $region61: #{tpu_custom_call.1} parent=0
    _
  %s8 = ssub.s32 1, %s6
  %s9 = scalar_select 0, %s8, %s6
  $region1: #{tpu_custom_call.1} parent=0
    #allocation2 [shape = 'u8[4096]{0}', space=smem, size = 0x1000, scoped, tag = 'input window, operand 3, single buffered']
    #allocation3 [shape = 's32[2]{0}', space=sflag, size = 0x8, scoped, tag = 'scoped memory for tpu_custom_call.1']
    #allocation4 [shape = 's32[2]{0}', space=sflag, size = 0x8, scoped, tag = 'scoped memory for tpu_custom_call.1']
    #allocation5 [shape = 'u8[512]{0}', space=smem, size = 0x200, scoped, tag = 'input window, operand 4, single buffered']
    #allocation6 [shape = 's32[1]{0}', space=sflag, size = 0x4, scoped, tag = 'scoped memory for tpu_custom_call.1']
    #allocation7 [shape = 'u8[8192]{0}', space=vmem, size = 0x2000, scoped, tag = 'output window, operand 0']
    %10 = vsyncpa [#allocation4], 0
    %11 = vsyncpa [#allocation6], 0
    %12 = vsyncpa [#allocation3], 0
    %s13 = scalar_lea.sflag [#allocation3], 1
    %14 = vsyncpa %s13, 0
    loop: start=0, step=1, limit=34
    $region2: #{tpu_custom_call.1} parent=1 // loop_pre_header
      _
    $region3: #{tpu_custom_call.1} parent=1 // loop_header
      %s16 = sphi 0, %s20
      %p17 = scmp.ge.s32.totalorder %s16, 34
      %s23 = sphi 0, %s42
      %s24 = sphi 0, %s38
      %s25 = sphi 0, %s34
      %s26 = sphi 0, %s23
      %s27 = sphi 0, %s24
      %s28 = sphi 0, %s25
      %s29 = sphi 0, %s26
      %s30 = sphi 0, %s27
      %s31 = sphi 0, %s28
      %s47 = sphi 0, %s49
      %s50 = sphi 0, %s47
      %s51 = sphi 0, %s50
      %s67 = sphi 0, %s51
      %s71 = sphi 0, %s71
      %s73 = sphi 0, %s71
      %s74 = sphi 0, %s73
      %s88 = sphi 0, %s74
      %s92 = sphi 0, %s92
      %s94 = sphi 0, %s92
      %s95 = sphi 0, %s94
      %s109 = sphi 0, %s95
      %s113 = sphi 0, %s113
      %s115 = sphi 0, %s113
      %s116 = sphi 0, %s115
      %s130 = sphi 0, %s116
      %s134 = sphi 0, %s134
      %s136 = sphi 0, %s134
      %s137 = sphi 0, %s136
      %s151 = sphi 0, %s137
      %s161 = sphi 0, %s163
      %s164 = sphi 0, %s161
      %s165 = sphi 0, %s164
      %s181 = sphi 0, %s165
    $region4: #{tpu_custom_call.1} parent=1 // loop_header_branch
      %19 = sbr.rel (%p17) target = $region8
    $region5: #{tpu_custom_call.1} parent=1 // loop_body
      %s21 = ssub.s32 %s16, 1
      %s22 = ssub.s32 %s16, 2
      %s32 = sadd.s32 1, %s25
      %p33 = scmp.ge.s32.totalorder %s32, 2
      %s34 = scalar_select %p33, 0, %s32
      %s35 = sadd.s32 1, %s24
      %s36 = scalar_select %p33, %s35, %s24
      %p37 = scmp.ge.s32.totalorder %s36, 8
      %s38 = scalar_select %p37, 0, %s36
      %s39 = sadd.s32 1, %s23
      %s40 = scalar_select %p37, %s39, %s23
      %p41 = scmp.ge.s32.totalorder %s40, 2
      %s42 = scalar_select %p41, 0, %s40
      %s43 = ssub.s32 %s23, %s42
      %s44 = ssub.s32 %s24, %s38
      %s45 = sor.u32 %s43, %s44
      %p46 = scmp.eq.s32.totalorder %s45, 0
      %s48 = sadd.s32 %s47, 1
      %s49 = scalar_select %p46, %s47, %s48
      %p52 = pneg %p46
      %p53 = scmp.eq.s32.totalorder %s16, 31
      %p54 = por %p52, %p53
      %p55 = scmp.ne.s32.totalorder %s47, %s50
      %p56 = scmp.eq.s32.totalorder %s16, 0
      %p57 = por %p55, %p56
      %p58 = scmp.ne.s32.totalorder %s47, %s50
      %p59 = scmp.eq.s32.totalorder %s21, 31
      %p60 = por %p58, %p59
      %p61 = scmp.ne.s32.totalorder %s50, %s51
      %p62 = scmp.eq.s32.totalorder %s21, 0
      %p63 = por %p61, %p62
      %p64 = scmp.ne.s32.totalorder %s50, %s51
      %p65 = scmp.eq.s32.totalorder %s22, 31
      %p66 = por %p64, %p65
      %p68 = scmp.ne.s32.totalorder %s51, %s67
      %p69 = scmp.eq.s32.totalorder %s22, 0
      %p70 = por %p68, %p69
      %s72 = sadd.s32 %s71, 1
      %p75 = scmp.eq.s32.totalorder %s16, 31
      %p76 = scmp.ne.s32.totalorder %s71, %s73
      %p77 = scmp.eq.s32.totalorder %s16, 0
      %p78 = por %p76, %p77
      %p79 = scmp.ne.s32.totalorder %s71, %s73
      %p80 = scmp.eq.s32.totalorder %s21, 31
      %p81 = por %p79, %p80
      %p82 = scmp.ne.s32.totalorder %s73, %s74
      %p83 = scmp.eq.s32.totalorder %s21, 0
      %p84 = por %p82, %p83
      %p85 = scmp.ne.s32.totalorder %s73, %s74
      %p86 = scmp.eq.s32.totalorder %s22, 31
      %p87 = por %p85, %p86
      %p89 = scmp.ne.s32.totalorder %s74, %s88
      %p90 = scmp.eq.s32.totalorder %s22, 0
      %p91 = por %p89, %p90
      %s93 = sadd.s32 %s92, 1
      %p96 = scmp.eq.s32.totalorder %s16, 31
      %p97 = scmp.ne.s32.totalorder %s92, %s94
      %p98 = scmp.eq.s32.totalorder %s16, 0
      %p99 = por %p97, %p98
      %p100 = scmp.ne.s32.totalorder %s92, %s94
      %p101 = scmp.eq.s32.totalorder %s21, 31
      %p102 = por %p100, %p101
      %p103 = scmp.ne.s32.totalorder %s94, %s95
      %p104 = scmp.eq.s32.totalorder %s21, 0
      %p105 = por %p103, %p104
      %p106 = scmp.ne.s32.totalorder %s94, %s95
      %p107 = scmp.eq.s32.totalorder %s22, 31
      %p108 = por %p106, %p107
      %p110 = scmp.ne.s32.totalorder %s95, %s109
      %p111 = scmp.eq.s32.totalorder %s22, 0
      %p112 = por %p110, %p111
      %s114 = sadd.s32 %s113, 1
      %p117 = scmp.eq.s32.totalorder %s16, 31
      %p118 = scmp.ne.s32.totalorder %s113, %s115
      %p119 = scmp.eq.s32.totalorder %s16, 0
      %p120 = por %p118, %p119
      %p121 = scmp.ne.s32.totalorder %s113, %s115
      %p122 = scmp.eq.s32.totalorder %s21, 31
      %p123 = por %p121, %p122
      %p124 = scmp.ne.s32.totalorder %s115, %s116
      %p125 = scmp.eq.s32.totalorder %s21, 0
      %p126 = por %p124, %p125
      %p127 = scmp.ne.s32.totalorder %s115, %s116
      %p128 = scmp.eq.s32.totalorder %s22, 31
      %p129 = por %p127, %p128
      %p131 = scmp.ne.s32.totalorder %s116, %s130
      %p132 = scmp.eq.s32.totalorder %s22, 0
      %p133 = por %p131, %p132
      %s135 = sadd.s32 %s134, 1
      %p138 = scmp.eq.s32.totalorder %s16, 31
      %p139 = scmp.ne.s32.totalorder %s134, %s136
      %p140 = scmp.eq.s32.totalorder %s16, 0
      %p141 = por %p139, %p140
      %p142 = scmp.ne.s32.totalorder %s134, %s136
      %p143 = scmp.eq.s32.totalorder %s21, 31
      %p144 = por %p142, %p143
      %p145 = scmp.ne.s32.totalorder %s136, %s137
      %p146 = scmp.eq.s32.totalorder %s21, 0
      %p147 = por %p145, %p146
      %p148 = scmp.ne.s32.totalorder %s136, %s137
      %p149 = scmp.eq.s32.totalorder %s22, 31
      %p150 = por %p148, %p149
      %p152 = scmp.ne.s32.totalorder %s137, %s151
      %p153 = scmp.eq.s32.totalorder %s22, 0
      %p154 = por %p152, %p153
      %s155 = ssub.s32 %s23, %s42
      %s156 = ssub.s32 %s24, %s38
      %s157 = sor.u32 %s155, %s156
      %s158 = ssub.s32 %s25, %s34
      %s159 = sor.u32 %s157, %s158
      %p160 = scmp.eq.s32.totalorder %s159, 0
      %s162 = sadd.s32 %s161, 1
      %s163 = scalar_select %p160, %s161, %s162
      %p166 = pneg %p160
      %p167 = scmp.eq.s32.totalorder %s16, 31
      %p168 = por %p166, %p167
      %p169 = scmp.ne.s32.totalorder %s161, %s164
      %p170 = scmp.eq.s32.totalorder %s16, 0
      %p171 = por %p169, %p170
      %p172 = scmp.ne.s32.totalorder %s161, %s164
      %p173 = scmp.eq.s32.totalorder %s21, 31
      %p174 = por %p172, %p173
      %p175 = scmp.ne.s32.totalorder %s164, %s165
      %p176 = scmp.eq.s32.totalorder %s21, 0
      %p177 = por %p175, %p176
      %p178 = scmp.ne.s32.totalorder %s164, %s165
      %p179 = scmp.eq.s32.totalorder %s22, 31
      %p180 = por %p178, %p179
      %p182 = scmp.ne.s32.totalorder %s165, %s181
      %p183 = scmp.eq.s32.totalorder %s22, 0
      %p184 = por %p182, %p183
      %p185 = scmp.le.s32.totalorder 1, %s16
      %p186 = scmp.lt.s32.totalorder %s16, 33
      %p187 = pnand %p185, %p186
      %p188 = pneg %p187
      // Predicated region
      $region9: #{tpu_custom_call.1} parent=5 // pred_check
        _
      $region10: #{tpu_custom_call.1} parent=5 // pred_check_branch
        %190 = sbr.rel (%p187) target = $region12
      $region11: #{tpu_custom_call.1} parent=5 // pred_region
        %s191 = ssub.s32 %s16, 1
        // Predicated region
        $region13: #{tpu_custom_call.1} parent=11 // pred_check
          %p192 = pneg %p84
        $region14: #{tpu_custom_call.1} parent=11 // pred_check_branch
          %194 = sbr.rel (%p192) target = $region16
        $region15: #{tpu_custom_call.1} parent=11 // pred_region
          _
        $region16: #{tpu_custom_call.1} parent=11 // pred_fallthru
          _
        // Predicated region
        $region17: #{tpu_custom_call.1} parent=11 // pred_check
          %p195 = pneg %p105
        $region18: #{tpu_custom_call.1} parent=11 // pred_check_branch
          %197 = sbr.rel (%p195) target = $region20
        $region19: #{tpu_custom_call.1} parent=11 // pred_region
          _
        $region20: #{tpu_custom_call.1} parent=11 // pred_fallthru
          _
        // Predicated region
        $region21: #{tpu_custom_call.1} parent=11 // pred_check
          %p198 = pneg %p126
        $region22: #{tpu_custom_call.1} parent=11 // pred_check_branch
          %200 = sbr.rel (%p198) target = $region24
        $region23: #{tpu_custom_call.1} parent=11 // pred_region
          %202 = vsyncadd [#allocation4], 0
          %s204 = sshll.u32 %s3, 4
          %s205 = int_to_ptr.vmem [resolvable:$true] %s204
          %207 = dma.vmem_to_smem %s205, 128, [#allocation2], [#allocation4]
        $region24: #{tpu_custom_call.1} parent=11 // pred_fallthru
          _
        // Predicated region
        $region25: #{tpu_custom_call.1} parent=11 // pred_check
          %p208 = pneg %p147
        $region26: #{tpu_custom_call.1} parent=11 // pred_check_branch
          %210 = sbr.rel (%p208) target = $region28
        $region27: #{tpu_custom_call.1} parent=11 // pred_region
          %212 = vsyncadd [#allocation6], 0
          %s214 = sshll.u32 %s4, 4
          %s215 = int_to_ptr.vmem [resolvable:$true] %s214
          %217 = dma.vmem_to_smem %s215, 16, [#allocation5], [#allocation6]
        $region28: #{tpu_custom_call.1} parent=11 // pred_fallthru
          _
      $region12: #{tpu_custom_call.1} parent=5 // pred_fallthru
        _
      %p218 = scmp.lt.s32.totalorder %s16, 32
      // Predicated region
      $region29: #{tpu_custom_call.1} parent=5 // pred_check
        %p219 = pneg %p218
      $region30: #{tpu_custom_call.1} parent=5 // pred_check_branch
        %221 = sbr.rel (%p219) target = $region32
      $region31: #{tpu_custom_call.1} parent=5 // pred_region
        // Predicated region
        $region33: #{tpu_custom_call.1} parent=31 // pred_check
          %p222 = pneg %p57
        $region34: #{tpu_custom_call.1} parent=31 // pred_check_branch
          %224 = sbr.rel (%p222) target = $region36
        $region35: #{tpu_custom_call.1} parent=31 // pred_region
          %p225 = scmp.lt.s32.totalorder %s23, 1
          %s226 = scalar_select %p225, %s23, 1
          %p227 = scmp.lt.s32.totalorder %s24, 7
          %s228 = scalar_select %p227, %s24, 7
          %s229 = smul.addr %s226, 8
          %s230 = sadd.s32 %s228, %s229
          %s231 = smul.addr %s230, 4
          %s232 = scalar_lea.vmem %s0, %s231
        $region36: #{tpu_custom_call.1} parent=31 // pred_fallthru
          _
      $region32: #{tpu_custom_call.1} parent=5 // pred_fallthru
        _
      %p233 = scmp.le.s32.totalorder 1, %s16
      %p234 = scmp.lt.s32.totalorder %s16, 33
      %p235 = pnand %p233, %p234
      %p236 = pneg %p235
      // Predicated region
      $region37: #{tpu_custom_call.1} parent=5 // pred_check
        _
      $region38: #{tpu_custom_call.1} parent=5 // pred_check_branch
        %238 = sbr.rel (%p235) target = $region40
      $region39: #{tpu_custom_call.1} parent=5 // pred_region
        %s239 = ssub.s32 %s16, 1
        // Predicated region
        $region41: #{tpu_custom_call.1} parent=39 // pred_check
          %p240 = pneg %p126
        $region42: #{tpu_custom_call.1} parent=39 // pred_check_branch
          %242 = sbr.rel (%p240) target = $region44
        $region43: #{tpu_custom_call.1} parent=39 // pred_region
          %244 = dma.done [#allocation4], 128
        $region44: #{tpu_custom_call.1} parent=39 // pred_fallthru
          _
        // Predicated region
        $region45: #{tpu_custom_call.1} parent=39 // pred_check
          %p245 = pneg %p147
        $region46: #{tpu_custom_call.1} parent=39 // pred_check_branch
          %247 = sbr.rel (%p245) target = $region48
        $region47: #{tpu_custom_call.1} parent=39 // pred_region
          %249 = dma.done [#allocation6], 16
        $region48: #{tpu_custom_call.1} parent=39 // pred_fallthru
          _
        %250 = sfence
        %p251 = scmp.lt.s32.totalorder %s26, 1
        %s252 = scalar_select %p251, %s26, 1
        %p253 = scmp.lt.s32.totalorder %s27, 7
        %s254 = scalar_select %p253, %s27, 7
        %s255 = smul.addr %s252, 8
        %s256 = sadd.s32 %s254, %s255
        %s257 = smul.addr %s256, 4
        %s258 = scalar_lea.vmem %s0, %s257
        %p259 = pneg %p63
        %p260 = pneg %p60
        %p261 = pneg %p84
        %p262 = pneg %p81
        %p263 = pneg %p105
        %p264 = pneg %p102
        %p265 = pneg %p126
        %p266 = pneg %p123
        %p267 = pneg %p147
        %p268 = pneg %p144
        %p269 = pneg %p177
        %p270 = pneg %p174
        %s271 = sand.u32 %s164, 1
        %s272 = scalar_lea.sflag [#allocation3], %s271
        %s273 = sand.u32 %s164, 1
        %s274 = smul.addr %s273, 8
        %s275 = scalar_lea.vmem [#allocation7], %s274
        %p276 = scmp.lt.s32.totalorder %s26, 1
        %s277 = scalar_select %p276, %s26, 1
        %p278 = scmp.lt.s32.totalorder %s27, 7
        %s279 = scalar_select %p278, %s27, 7
        %s280 = smul.addr %s277, 8
        %s281 = sadd.s32 %s279, %s280
        %s282 = smul.addr %s281, 4
        %s283 = scalar_lea.vmem %s0, %s282
        %v284 = vld [vmem:[%s283] sm:$0xf]
        %v285 = vld [vmem:[%s1] sm:$0xf]
        %vm286 = vcmask 31744
        %v288 = vsel %vm286, %v284, 0
        %vm290 = vcmask 1043456
        %v292 = vsel %vm290, %v285, 0
        %294 = vmatpush.msra.mxu0 0.0
        %295 = vmatpush.msra.mxu0 0.0
        %296 = vmatpush.msra.mxu0 0.0
        %297 = vmatpush.msra.mxu0 0.0
        %298 = vmatpush.msra.mxu0 0.0
        %299 = vmatpush.msra.mxu0 0.0
        %300 = vmatpush.msra.mxu0 0.0
        %301 = vmatpush.msra.mxu0 0.0
        %302 = vmatpush.msra.mxu0 0.0
        %303 = vmatpush.msra.mxu0 0.0
        %304 = vmatpush.msra.mxu0 0.0
        %305 = vmatpush.msra.mxu0 0.0
        %306 = vmatpush.msra.mxu0 0.0
        %307 = vmatpush.msra.mxu0 0.0
        %308 = vmatpush.msra.mxu0 0.0
        %309 = vmatpush.msra.mxu0 %v292
        %310 = vmatmul.f32.gmra.mxu0 %v288
        %v311 = vpop.f32.mrf.mxu0
        %v312 = vadd.f32 0.0, %v311
        %313 = vdwg.mxu0
        %s314 = smul.u32 %s28, 8
        %s315 = scalar_lea.vmem %s2, %s314
        %v316 = vld [vmem:[%s315] sm:$0xff]
        %v317 = vld [vmem:[%s315 + $0x8] sm:$0xff]
        %v319 = vsel %vm286, %v316, 0
        %v322 = vsel %vm286, %v317, 0
        %v325 = vsel %vm290, %v312, 0
        %327 = vmatpush.msra.mxu0 0.0
        %328 = vmatpush.msra.mxu0 0.0
        %329 = vmatpush.msra.mxu0 0.0
        %330 = vmatpush.msra.mxu0 0.0
        %331 = vmatpush.msra.mxu0 0.0
        %332 = vmatpush.msra.mxu0 0.0
        %333 = vmatpush.msra.mxu0 0.0
        %334 = vmatpush.msra.mxu0 0.0
        %335 = vmatpush.msra.mxu0 0.0
        %336 = vmatpush.msra.mxu0 0.0
        %337 = vmatpush.msra.mxu0 0.0
        %338 = vmatpush.msra.mxu0 0.0
        %339 = vmatpush.msra.mxu0 0.0
        %340 = vmatpush.msra.mxu0 0.0
        %341 = vmatpush.msra.mxu0 0.0
        %342 = vmatpush.msra.mxu0 %v325
        %343 = vmatmul.f32.gmra.mxu0 %v319
        %v344 = vpop.f32.mrf.mxu0
        %v345 = vadd.f32 0.0, %v344
        %346 = vmatmul.f32.gmra.mxu0 %v322
        %v347 = vpop.f32.mrf.mxu0
        %v348 = vadd.f32 0.0, %v347
        %349 = vdwg.mxu0
        %s350 = smul.u32 %s27, 128
        %s351 = sld [smem:[#allocation2 + %s350]]
        %v352 = vstv %s351
        %v353 = vmul.f32 %v352, %v345
        %v354 = vadd.f32 %v353, 0.0
        %s355 = sadd.s32 %s350, 1
        %s356 = sld [smem:[#allocation2 + %s355]]
        %v357 = vstv %s356
        %v358 = vmul.f32 %v357, %v345
        %360 = vrot.lane.b32.xlu0 %v358, 124
        %v361 = vpop.permute.xlu0 %360
        %v363 = vadd.f32 %v354, %v361
        %s364 = sadd.s32 %s350, 2
        %s365 = sld [smem:[#allocation2 + %s364]]
        %v366 = vstv %s365
        %v367 = vmul.f32 %v366, %v345
        %369 = vrot.lane.b32.xlu0 %v367, 120
        %v370 = vpop.permute.xlu0 %369
        %v372 = vadd.f32 %v363, %v370
        %s373 = sadd.s32 %s350, 3
        %s374 = sld [smem:[#allocation2 + %s373]]
        %v375 = vstv %s374
        %v376 = vmul.f32 %v375, %v345
        %v377 = vmul.f32 %v375, %v348
        %v380 = vrot.slane %v376, 4
        %v381 = vrot.slane %v377, 4
        %v382 = vsel %vm290, %v380, %v381
        %v384 = vadd.f32 %v372, %v382
        %s385 = sadd.s32 %s350, 4
        %s386 = sld [smem:[#allocation2 + %s385]]
        %v387 = vstv %s386
        %v388 = vmul.f32 %v387, %v345
        %v389 = vmul.f32 %v387, %v348
        %v392 = vrot.slane %v388, 4
        %v393 = vrot.slane %v389, 4
        %v394 = vsel %vm290, %v392, %v393
        %395 = vrot.lane.b32.xlu0 %v394, 124
        %v396 = vpop.permute.xlu0 %395
        %v398 = vadd.f32 %v384, %v396
        %s399 = sadd.s32 %s350, 5
        %s400 = sld [smem:[#allocation2 + %s399]]
        %v401 = vstv %s400
        %v402 = vmul.f32 %v401, %v345
        %v403 = vmul.f32 %v401, %v348
        %v406 = vrot.slane %v402, 4
        %v407 = vrot.slane %v403, 4
        %v408 = vsel %vm290, %v406, %v407
        %409 = vrot.lane.b32.xlu0 %v408, 120
        %v410 = vpop.permute.xlu0 %409
        %v412 = vadd.f32 %v398, %v410
        %s413 = sadd.s32 %s350, 6
        %s414 = sld [smem:[#allocation2 + %s413]]
        %v415 = vstv %s414
        %v416 = vmul.f32 %v415, %v348
        %v417 = vadd.f32 %v412, %v416
        %s418 = sadd.s32 %s350, 7
        %s419 = sld [smem:[#allocation2 + %s418]]
        %v420 = vstv %s419
        %v421 = vmul.f32 %v420, %v348
        %423 = vrot.lane.b32.xlu0 %v421, 124
        %v424 = vpop.permute.xlu0 %423
        %v426 = vadd.f32 %v417, %v424
        %s427 = sadd.s32 %s350, 8
        %s428 = sld [smem:[#allocation2 + %s427]]
        %v429 = vstv %s428
        %v430 = vmul.f32 %v429, %v348
        %432 = vrot.lane.b32.xlu0 %v430, 120
        %v433 = vpop.permute.xlu0 %432
        %v435 = vadd.f32 %v426, %v433
        %s436 = sld [smem:[#allocation5 + %s27]]
        %v437 = vstv %s436
        %v438 = vadd.f32 %v435, %v437
        %v439 = vmax.f32 %v438, 0.0
        %vm440 = vcmask 130048
        %441 = vst.msk [vmem:[%s275] sm:$0xff] %vm440, %v439
        %s442 = sand.u32 %s164, 1
        %s443 = scalar_lea.sflag [#allocation3], %s442
        %s444 = sand.u32 %s164, 1
        %s445 = smul.addr %s444, 8
        %s446 = scalar_lea.vmem [#allocation7], %s445
        // Predicated region
        $region49: #{tpu_custom_call.1} parent=39 // pred_check
          %p447 = pneg %p174
        $region50: #{tpu_custom_call.1} parent=39 // pred_check_branch
          %449 = sbr.rel (%p447) target = $region52
        $region51: #{tpu_custom_call.1} parent=39 // pred_region
          %451 = vsyncadd %s443, 0
          %s452 = smul.addr %s27, 2
          %s453 = sadd.s32 %s28, %s452
          %s454 = smul.addr %s26, 16
          %s455 = sadd.s32 %s453, %s454
          %s456 = smul.addr %s455, 8
          %s457 = scalar_lea.hbm %s5, %s456
          %s459 = sshll.u32 %s446, 4
          %s460 = int_to_ptr.vmem [resolvable:$true] %s459
          %s461 = sshll.u32 %s457, 4
          %s462 = int_to_ptr.hbm [resolvable:$true] %s461
          %464 = dma.vmem_to_hbm [thread:$0]  %s460, 128, %s462, %s443
        $region52: #{tpu_custom_call.1} parent=39 // pred_fallthru
          _
      $region40: #{tpu_custom_call.1} parent=5 // pred_fallthru
        _
      %p465 = scmp.le.s32.totalorder 2, %s16
      // Predicated region
      $region53: #{tpu_custom_call.1} parent=5 // pred_check
        %p466 = pneg %p465
      $region54: #{tpu_custom_call.1} parent=5 // pred_check_branch
        %468 = sbr.rel (%p466) target = $region56
      $region55: #{tpu_custom_call.1} parent=5 // pred_region
        %s469 = ssub.s32 %s16, 2
        // Predicated region
        $region57: #{tpu_custom_call.1} parent=55 // pred_check
          %p470 = pneg %p180
        $region58: #{tpu_custom_call.1} parent=55 // pred_check_branch
          %472 = sbr.rel (%p470) target = $region60
        $region59: #{tpu_custom_call.1} parent=55 // pred_region
          %s473 = sand.u32 %s165, 1
          %s474 = scalar_lea.sflag [#allocation3], %s473
          %s475 = sand.u32 %s165, 1
          %s476 = smul.addr %s475, 8
          %s477 = scalar_lea.vmem [#allocation7], %s476
          %479 = dma.done %s474, 128
        $region60: #{tpu_custom_call.1} parent=55 // pred_fallthru
          _
      $region56: #{tpu_custom_call.1} parent=5 // pred_fallthru
        _
    $region6: #{tpu_custom_call.1} parent=1 // loop_footer
      %s20 = sadd.s32 1, %s16
    $region7: #{tpu_custom_call.1} parent=1 // loop_footer_branch
      %15 = sbr.rel target = $region3
    $region8: #{tpu_custom_call.1} parent=1 // loop_exit
      _
    %480 = vsyncpa [#allocation3], 1
    %s481 = scalar_lea.sflag [#allocation3], 1
    %482 = vsyncpa %s481, 1
    %483 = vsyncpa [#allocation4], 1
    %s484 = scalar_lea.sflag [#allocation4], 1
    %485 = vsyncpa %s484, 1
    %486 = vsyncpa [#allocation6], 1

</llo_original>
